<compile_context>
chip_gen: v7x
topology: tpu7x:2x2x1
jax: 0.10.0
libtpu: 0.0.40
codegen_flags: <defaults>
</compile_context>

<pallas_src>
from typing import NamedTuple

import numpy as np
import jax
import jax.numpy as jnp
from jax.experimental import pallas as pl
from jax.experimental.pallas import tpu as pltpu


class ModelReturn(NamedTuple):
    z: jax.Array
    progs: jax.Array
    progs_logits: jax.Array
    progs_masks: jax.Array
    a_h: jax.Array
    a_h_logits: jax.Array
    a_h_masks: jax.Array


# ----------------------------- Pallas kernel ------------------------------ #

def _log_softmax_argmax_block(x_ref, lp_ref, am_ref):
    """Stable LogSoftmax + first-occurrence argmax over the last axis of a tile."""
    x = x_ref[...].astype(jnp.float32)
    m = jnp.max(x, axis=-1, keepdims=True)
    shifted = x - m                                   # x dies here (fewer live temps)

    # Argmax from `shifted >= 0` (== `x >= max`); int32 work issued before the
    # exp/sum pipeline so int32 and f32 working sets don't peak together.
    ids = jax.lax.broadcasted_iota(jnp.int32, shifted.shape, 1)
    sentinel = jnp.int32(jnp.iinfo(jnp.int32).max)
    cand = jnp.where(shifted >= 0.0, ids, sentinel)
    am_ref[...] = jnp.min(cand, axis=-1, keepdims=True)

    lse = jnp.log(jnp.sum(jnp.exp(shifted), axis=-1, keepdims=True))
    lp_ref[...] = (shifted - lse).astype(lp_ref.dtype)


def _make_fused_kernel(n_tensors: int):
    def kernel(*refs):
        # refs = (x_0..x_{n-1}, lp_0, am_0, lp_1, am_1, ...)
        for t in range(n_tensors):
            _log_softmax_argmax_block(
                refs[t], refs[n_tensors + 2 * t], refs[n_tensors + 2 * t + 1])
    return kernel


# --------------------------- tile / grid sizing ---------------------------- #

_TARGET_STEP_BYTES = 1 << 20        # aim for ~1 MiB of HBM traffic per grid step


def _round_up(x: int, m: int) -> int:
    return ((x + m - 1) // m) * m


def _physical_vmem_bytes() -> int:
    phys = 64 * 1024 * 1024         # conservative default (v7x per-TC VMEM)
    try:
        phys = int(pltpu.get_tpu_info().vmem_capacity_bytes)
    except Exception:
        pass
    return phys


def _step_footprint_bytes(rows_list, vocab_list, in_bytes_list, out_bytes_list, g):
    """Estimated per-step VMEM footprint (lane padding + temporaries included)."""
    total = 0
    for r, v, ib, ob in zip(rows_list, vocab_list, in_bytes_list, out_bytes_list):
        t = _round_up(pl.cdiv(r, g), 8)
        vp = _round_up(v, 128)
        total += 2 * t * vp * ib        # input tile, double-buffered
        total += 2 * t * vp * ob        # log-prob tile, double-buffered
        total += 2 * t * 128 * 4        # argmax (t,1) tile pads to 128 lanes
        total += 4 * t * vp * 4         # in-kernel f32/int32 temporaries
    return total


def _select_grid(rows_list, vocab_list, in_bytes_list, out_bytes_list, budget):
    # Largest grid for which every tensor still gets >= 8 rows per block.
    g_max = min(pl.cdiv(r, 8) for r in rows_list)

    # Bytes-per-step-driven grid size: enough steps that each moves ~1 MiB.
    hbm_bytes = sum(r * v * (ib + ob) + r * 4
                    for r, v, ib, ob in
                    zip(rows_list, vocab_list, in_bytes_list, out_bytes_list))
    g = max(1, hbm_bytes // _TARGET_STEP_BYTES)
    g = min(g, g_max)

    # v7x: make the "parallel" row axis shardable across both TensorCores.
    # (On single-TC chips the extra ~0.35us step is negligible.)
    if g < 2 <= g_max:
        g = 2

    # Shrink tiles (raise g) until the per-step footprint fits the VMEM budget.
    while (g < g_max and
           _step_footprint_bytes(rows_list, vocab_list,
                                 in_bytes_list, out_bytes_list, g) > budget):
        g += 1

    # Every tensor must split into exactly g sublane-aligned blocks (no fully
    # out-of-bounds blocks); rounding tiles up to 8 rows can overshoot, so back off.
    while g > 1:
        if all(pl.cdiv(r, _round_up(pl.cdiv(r, g), 8)) == g for r in rows_list):
            break
        g -= 1

    tiles = [_round_up(pl.cdiv(r, g), 8) for r in rows_list]
    return g, tiles


# ------------------------------ fused wrapper ------------------------------ #

def fused_log_softmax_argmax(*logits, out_dtypes=None):
    """LogSoftmax (dim=-1) + argmax for each input tensor in ONE Pallas launch.

    Returns a tuple with one (log_probs, argmax_int32) pair per input.
    `out_dtypes` optionally overrides the log-prob output dtypes (e.g. bf16).
    """
    n = len(logits)
    assert n >= 1
    if out_dtypes is None:
        out_dtypes = [x.dtype for x in logits]

    shapes = [x.shape for x in logits]
    rows_list, vocab_list, x2s = [], [], []
    for x in logits:
        v = int(x.shape[-1])
        r = 1
        for d in x.shape[:-1]:
            r *= int(d)
        rows_list.append(r)
        vocab_list.append(v)
        x2s.append(x.reshape(r, v))

    in_bytes_list = [np.dtype(x.dtype).itemsize for x in logits]
    out_bytes_list = [np.dtype(d).itemsize for d in out_dtypes]

    # Generation-aware VMEM budget (~40% of physical, at least 8 MiB).
    phys_vmem = _physical_vmem_bytes()
    budget = max(8 * 1024 * 1024, (phys_vmem * 2) // 5)
    g, tiles = _select_grid(rows_list, vocab_list, in_bytes_list, out_bytes_list, budget)
    footprint = _step_footprint_bytes(rows_list, vocab_list,
                                      in_bytes_list, out_bytes_list, g)
    vmem_limit = int(min((phys_vmem * 3) // 4,
                         max(32 * 1024 * 1024, footprint + (4 << 20))))

    out_shape, in_specs, out_specs = [], [], []
    for r, v, t, od in zip(rows_list, vocab_list, tiles, out_dtypes):
        in_specs.append(pl.BlockSpec((t, v), lambda i: (i, 0)))
        out_shape.append(jax.ShapeDtypeStruct((r, v), od))
        out_shape.append(jax.ShapeDtypeStruct((r, 1), jnp.int32))
        out_specs.append(pl.BlockSpec((t, v), lambda i: (i, 0)))
        out_specs.append(pl.BlockSpec((t, 1), lambda i: (i, 0)))

    outs = pl.pallas_call(
        _make_fused_kernel(n),
        out_shape=tuple(out_shape),
        grid_spec=pl.GridSpec(
            grid=(g,),
            in_specs=in_specs,
            out_specs=tuple(out_specs),
        ),
        compiler_params=pltpu.CompilerParams(
            dimension_semantics=("parallel",),
            vmem_limit_bytes=vmem_limit),
    )(*x2s)

    results = []
    for i, shp in enumerate(shapes):
        lp = outs[2 * i].reshape(shp)
        am = outs[2 * i + 1].reshape(shp[:-1])
        results.append((lp, am))
    return tuple(results)


# ------------------------------- BaseVAE ----------------------------------- #

class BaseVAEPallas:
    """JAX/Pallas port of the concrete parts of BaseVAE.

    The PyTorch BaseVAE.forward() is abstract (raises NotImplementedError);
    `apply_log_softmax_and_pack` reproduces the work the base class actually
    defines (LogSoftmax over the last dim + ModelReturn packing).
    """

    def __init__(self,
                 num_program_tokens: int,
                 num_agent_actions: int,
                 max_program_length: int = 45,
                 max_demo_length: int = 100,
                 hidden_size: int = 256,
                 model_seed: int = 1):
        self.num_program_tokens = num_program_tokens
        self.num_agent_actions = num_agent_actions
        self.max_program_length = max_program_length
        self.max_demo_length = max_demo_length
        self.hidden_size = hidden_size
        # Deterministic parameter seed (mirrors torch.manual_seed(model_seed)).
        # BaseVAE defines no trainable weights itself; subclasses do.
        self.param_key = jax.random.PRNGKey(model_seed)
        self.softmax = fused_log_softmax_argmax  # fused LogSoftmax + argmax

    def forward(self, data_batch, prog_teacher_enforcing=True,
                a_h_teacher_enforcing=True) -> ModelReturn:
        # TODO(synk): BaseVAE.forward raises NotImplementedError in the
        # reference; subclasses implement the encoder/decoder. We expose the
        # base-class compute (LogSoftmax + ModelReturn packing) instead.
        z, progs_logits, a_h_logits = data_batch
        return self.apply_log_softmax_and_pack(z, progs_logits, a_h_logits)

    def apply_log_softmax_and_pack(self, z, progs_logits, a_h_logits) -> ModelReturn:
        # ONE fused Pallas launch for both logits tensors (log-softmax + argmax).
        (progs_log_probs, progs), (a_h_log_probs, a_h) = self.softmax(
            progs_logits, a_h_logits)
        progs_masks = jnp.ones(progs.shape, dtype=jnp.bool_)
        a_h_masks = jnp.ones(a_h.shape, dtype=jnp.bool_)
        return ModelReturn(
            z=z,
            progs=progs,
            progs_logits=progs_log_probs,
            progs_masks=progs_masks,
            a_h=a_h,
            a_h_logits=a_h_log_probs,
            a_h_masks=a_h_masks,
        )


# --------------------------------- main ------------------------------------ #

if __name__ == "__main__":
    key = jax.random.PRNGKey(0)
    k_z, k_prog, k_ah = jax.random.split(key, 3)

    batch = 2
    seq_prog = 8           # small max_program_length
    seq_demo = 8           # small max_demo_length
    num_program_tokens = 35
    num_agent_actions = 6  # len(actions) + 1
    hidden_size = 32

    model = BaseVAEPallas(
        num_program_tokens=num_program_tokens,
        num_agent_actions=num_agent_actions,
        max_program_length=seq_prog,
        max_demo_length=seq_demo,
        hidden_size=hidden_size,
        model_seed=1,
    )

    z = jax.random.normal(k_z, (batch, hidden_size), dtype=jnp.float32)
    progs_logits = jax.random.normal(
        k_prog, (batch, seq_prog, num_program_tokens), dtype=jnp.float32)
    a_h_logits = jax.random.normal(
        k_ah, (batch, seq_demo, num_agent_actions), dtype=jnp.float32)

    out = model.forward((z, progs_logits, a_h_logits))
    jax.block_until_ready(out)

    # Correctness check vs. pure-JAX reference (torch.nn.LogSoftmax semantics).
    ref_p = jax.nn.log_softmax(progs_logits, axis=-1)
    ref_a = jax.nn.log_softmax(a_h_logits, axis=-1)
    assert jnp.allclose(out.progs_logits, ref_p, atol=1e-5, rtol=1e-5)
    assert jnp.allclose(out.a_h_logits, ref_a, atol=1e-5, rtol=1e-5)
    assert jnp.array_equal(out.progs, jnp.argmax(progs_logits, axis=-1))
    assert jnp.array_equal(out.a_h, jnp.argmax(a_h_logits, axis=-1))
    assert out.progs.shape == (batch, seq_prog)
    assert out.a_h.shape == (batch, seq_demo)

    # Second check: non-multiple-of-8 row counts and different seq lengths per
    # tensor (exercises the ragged / masked last blocks and mismatched grids).
    k_p2, k_a2 = jax.random.split(jax.random.PRNGKey(1))
    p2 = jax.random.normal(k_p2, (3, 5, num_program_tokens), dtype=jnp.float32)
    a2 = jax.random.normal(k_a2, (3, 7, num_agent_actions), dtype=jnp.float32)
    (lp_p2, am_p2), (lp_a2, am_a2) = fused_log_softmax_argmax(p2, a2)
    jax.block_until_ready((lp_p2, am_p2, lp_a2, am_a2))
    assert jnp.allclose(lp_p2, jax.nn.log_softmax(p2, axis=-1), atol=1e-5, rtol=1e-5)
    assert jnp.allclose(lp_a2, jax.nn.log_softmax(a2, axis=-1), atol=1e-5, rtol=1e-5)
    assert jnp.array_equal(am_p2, jnp.argmax(p2, axis=-1))
    assert jnp.array_equal(am_a2, jnp.argmax(a2, axis=-1))

    print("KERNEL_OK")
</pallas_src>

<mosaic_0001>
module attributes {stable_mosaic.version = 11 : i64} {
  func.func @kernel(%arg0: i32, %arg1: memref<8x35xf32, #tpu.memory_space<vmem>>, %arg2: memref<8x6xf32, #tpu.memory_space<vmem>>, %arg3: memref<8x35xf32, #tpu.memory_space<vmem>>, %arg4: memref<8x1xi32, #tpu.memory_space<vmem>>, %arg5: memref<8x6xf32, #tpu.memory_space<vmem>>, %arg6: memref<8x1xi32, #tpu.memory_space<vmem>>) attributes {dimension_semantics = [#tpu.dimension_semantics<parallel>], iteration_bounds = array<i64: 2>, scalar_prefetch = 0 : i64, scratch_operands = 0 : i64, tpu.core_type = #tpu.core_type<tc>, window_params = [{transform_indices = @transform_0, window_bounds = array<i64: 8, 35>}, {transform_indices = @transform_1, window_bounds = array<i64: 8, 6>}, {transform_indices = @transform_2, window_bounds = array<i64: 8, 35>}, {transform_indices = @transform_3, window_bounds = array<i64: 8, 1>}, {transform_indices = @transform_4, window_bounds = array<i64: 8, 6>}, {transform_indices = @transform_5, window_bounds = array<i64: 8, 1>}]} {
    %c0 = arith.constant 0 : index
    %c0_0 = arith.constant 0 : index
    %0 = vector.load %arg1[%c0, %c0_0] : memref<8x35xf32, #tpu.memory_space<vmem>>, vector<8x35xf32>
    %cst = arith.constant dense<0xFF800000> : vector<8xf32>
    %1 = vector.multi_reduction <maximumf>, %0, %cst [1] : vector<8x35xf32> to vector<8xf32>
    %2 = vector.shape_cast %1 : vector<8xf32> to vector<8x1xf32>
    %3 = vector.broadcast %2 : vector<8x1xf32> to vector<8x35xf32>
    %4 = arith.subf %0, %3 : vector<8x35xf32>
    %5 = tpu.iota {dimensions = array<i32: 1>} : vector<8x35xi32>
    %cst_1 = arith.constant 0.000000e+00 : f32
    %6 = vector.broadcast %cst_1 : f32 to vector<8x35xf32>
    %7 = arith.cmpf oge, %4, %6 : vector<8x35xf32>
    %c2147483647_i32 = arith.constant 2147483647 : i32
    %8 = vector.broadcast %c2147483647_i32 : i32 to vector<8x35xi32>
    %9 = arith.select %7, %5, %8 : vector<8x35xi1>, vector<8x35xi32>
    %cst_2 = arith.constant dense<2147483647> : vector<8xi32>
    %10 = vector.multi_reduction <minsi>, %9, %cst_2 [1] : vector<8x35xi32> to vector<8xi32>
    %11 = vector.shape_cast %10 : vector<8xi32> to vector<8x1xi32>
    %c0_3 = arith.constant 0 : index
    %c0_4 = arith.constant 0 : index
    %12 = vector.load %arg4[%c0_3, %c0_4] : memref<8x1xi32, #tpu.memory_space<vmem>>, vector<8x1xi32>
    tpu.vector_store %arg4[%c0_3, %c0_4], %11 {strides = array<i32>} : memref<8x1xi32, #tpu.memory_space<vmem>>, vector<8x1xi32>,
    %13 = math.exp %4 : vector<8x35xf32>
    %cst_5 = arith.constant dense<0.000000e+00> : vector<8xf32>
    %14 = vector.multi_reduction <add>, %13, %cst_5 [1] : vector<8x35xf32> to vector<8xf32>
    %15 = vector.shape_cast %14 : vector<8xf32> to vector<8x1xf32>
    %16 = math.log %15 : vector<8x1xf32>
    %17 = vector.broadcast %16 : vector<8x1xf32> to vector<8x35xf32>
    %18 = arith.subf %4, %17 : vector<8x35xf32>
    %c0_6 = arith.constant 0 : index
    %c0_7 = arith.constant 0 : index
    %19 = vector.load %arg3[%c0_6, %c0_7] : memref<8x35xf32, #tpu.memory_space<vmem>>, vector<8x35xf32>
    tpu.vector_store %arg3[%c0_6, %c0_7], %18 {strides = array<i32>} : memref<8x35xf32, #tpu.memory_space<vmem>>, vector<8x35xf32>,
    %c0_8 = arith.constant 0 : index
    %c0_9 = arith.constant 0 : index
    %20 = vector.load %arg2[%c0_8, %c0_9] : memref<8x6xf32, #tpu.memory_space<vmem>>, vector<8x6xf32>
    %cst_10 = arith.constant dense<0xFF800000> : vector<8xf32>
    %21 = vector.multi_reduction <maximumf>, %20, %cst_10 [1] : vector<8x6xf32> to vector<8xf32>
    %22 = vector.shape_cast %21 : vector<8xf32> to vector<8x1xf32>
    %23 = vector.broadcast %22 : vector<8x1xf32> to vector<8x6xf32>
    %24 = arith.subf %20, %23 : vector<8x6xf32>
    %25 = tpu.iota {dimensions = array<i32: 1>} : vector<8x6xi32>
    %cst_11 = arith.constant 0.000000e+00 : f32
    %26 = vector.broadcast %cst_11 : f32 to vector<8x6xf32>
    %27 = arith.cmpf oge, %24, %26 : vector<8x6xf32>
    %c2147483647_i32_12 = arith.constant 2147483647 : i32
    %28 = vector.broadcast %c2147483647_i32_12 : i32 to vector<8x6xi32>
    %29 = arith.select %27, %25, %28 : vector<8x6xi1>, vector<8x6xi32>
    %cst_13 = arith.constant dense<2147483647> : vector<8xi32>
    %30 = vector.multi_reduction <minsi>, %29, %cst_13 [1] : vector<8x6xi32> to vector<8xi32>
    %31 = vector.shape_cast %30 : vector<8xi32> to vector<8x1xi32>
    %c0_14 = arith.constant 0 : index
    %c0_15 = arith.constant 0 : index
    %32 = vector.load %arg6[%c0_14, %c0_15] : memref<8x1xi32, #tpu.memory_space<vmem>>, vector<8x1xi32>
    tpu.vector_store %arg6[%c0_14, %c0_15], %31 {strides = array<i32>} : memref<8x1xi32, #tpu.memory_space<vmem>>, vector<8x1xi32>,
    %33 = math.exp %24 : vector<8x6xf32>
    %cst_16 = arith.constant dense<0.000000e+00> : vector<8xf32>
    %34 = vector.multi_reduction <add>, %33, %cst_16 [1] : vector<8x6xf32> to vector<8xf32>
    %35 = vector.shape_cast %34 : vector<8xf32> to vector<8x1xf32>
    %36 = math.log %35 : vector<8x1xf32>
    %37 = vector.broadcast %36 : vector<8x1xf32> to vector<8x6xf32>
    %38 = arith.subf %24, %37 : vector<8x6xf32>
    %c0_17 = arith.constant 0 : index
    %c0_18 = arith.constant 0 : index
    %39 = vector.load %arg5[%c0_17, %c0_18] : memref<8x6xf32, #tpu.memory_space<vmem>>, vector<8x6xf32>
    tpu.vector_store %arg5[%c0_17, %c0_18], %38 {strides = array<i32>} : memref<8x6xf32, #tpu.memory_space<vmem>>, vector<8x6xf32>,
    return
  }
  func.func @transform_0(%arg0: i32) -> (i32, i32) {
    %c0_i32 = arith.constant 0 : i32
    %c0_i32_0 = arith.constant 0 : i32
    return %arg0, %c0_i32 : i32, i32
  }
  func.func @transform_1(%arg0: i32) -> (i32, i32) {
    %c0_i32 = arith.constant 0 : i32
    %c0_i32_0 = arith.constant 0 : i32
    return %arg0, %c0_i32 : i32, i32
  }
  func.func @transform_2(%arg0: i32) -> (i32, i32) {
    %c0_i32 = arith.constant 0 : i32
    %c0_i32_0 = arith.constant 0 : i32
    return %arg0, %c0_i32 : i32, i32
  }
  func.func @transform_3(%arg0: i32) -> (i32, i32) {
    %c0_i32 = arith.constant 0 : i32
    %c0_i32_0 = arith.constant 0 : i32
    return %arg0, %c0_i32 : i32, i32
  }
  func.func @transform_4(%arg0: i32) -> (i32, i32) {
    %c0_i32 = arith.constant 0 : i32
    %c0_i32_0 = arith.constant 0 : i32
    return %arg0, %c0_i32 : i32, i32
  }
  func.func @transform_5(%arg0: i32) -> (i32, i32) {
    %c0_i32 = arith.constant 0 : i32
    %c0_i32_0 = arith.constant 0 : i32
    return %arg0, %c0_i32 : i32, i32
  }
}

</mosaic_0001>

<llo_original>
// kernel: tpu_custom_call.1
$region0: #{tpu_custom_call.1}
  #allocation0 [shape = 'u32[]', space=smem, size = 0x4, offset = 0x4, fixed_abs, tag = 'smem constant byte address 0x4 - core index']
  #allocation1 [shape = 'u32[144,128]{1,0:T(1,128)}', space=vmem, size = 0x12000, scoped, tag = 'internal scratch']
  %s0 = inlined_call_operand.vmem [shape: f32[16,35], index: 0, kind: input, shape index: {}]
  %s1 = inlined_call_operand.vmem [shape: f32[16,6], index: 1, kind: input, shape index: {}]
  %s2 = inlined_call_operand.hbm [shape: f32[16,35], index: 2, kind: output, shape index: {0}]
  %s3 = inlined_call_operand.vmem [shape: s32[16,1], index: 3, kind: output, shape index: {1}]
  %s4 = inlined_call_operand.vmem [shape: f32[16,6], index: 4, kind: output, shape index: {2}]
  %s5 = inlined_call_operand.vmem [shape: s32[16,1], index: 5, kind: output, shape index: {3}]
  %6 = xla_tuple %s2, %s3, %s4, %s5
  %s7 = sld [smem:[#allocation0]]
  $region65: #{tpu_custom_call.1} parent=0
    _
  %s9 = ssub.s32 1, %s7
  %s10 = scalar_select 0, %s9, %s7
  $region1: #{tpu_custom_call.1} parent=0
    #allocation2 [shape = 'u8[8192]{0}', space=vmem, size = 0x2000, scoped, tag = 'output window, operand 0']
    #allocation3 [shape = 's32[2]{0}', space=sflag, size = 0x8, scoped, tag = 'scoped memory for tpu_custom_call.1']
    %11 = vsyncpa [#allocation3], 0
    %s12 = scalar_lea.sflag [#allocation3], 1
    %13 = vsyncpa %s12, 0
    loop: start=0, step=1, limit=4
    $region2: #{tpu_custom_call.1} parent=1 // loop_pre_header
      _
    $region3: #{tpu_custom_call.1} parent=1 // loop_header
      %s15 = sphi 0, %s19
      %p16 = scmp.ge.s32.totalorder %s15, 4
      %s25 = sphi 0, %s27
      %s28 = sphi 0, %s25
      %s29 = sphi 0, %s28
      %s45 = sphi 0, %s29
      %s51 = sphi 0, %s53
      %s54 = sphi 0, %s51
      %s55 = sphi 0, %s54
      %s71 = sphi 0, %s55
      %s77 = sphi 0, %s79
      %s80 = sphi 0, %s77
      %s81 = sphi 0, %s80
      %s97 = sphi 0, %s81
      %s103 = sphi 0, %s105
      %s106 = sphi 0, %s103
      %s107 = sphi 0, %s106
      %s123 = sphi 0, %s107
      %s129 = sphi 0, %s131
      %s132 = sphi 0, %s129
      %s133 = sphi 0, %s132
      %s149 = sphi 0, %s133
      %s155 = sphi 0, %s157
      %s158 = sphi 0, %s155
      %s159 = sphi 0, %s158
      %s175 = sphi 0, %s159
    $region4: #{tpu_custom_call.1} parent=1 // loop_header_branch
      %18 = sbr.rel (%p16) target = $region8
    $region5: #{tpu_custom_call.1} parent=1 // loop_body
      %s20 = ssub.s32 %s15, 1
      %s21 = ssub.s32 %s15, 2
      %s22 = sadd.s32 %s15, 1
      %s23 = ssub.s32 %s15, %s22
      %p24 = scmp.eq.s32.totalorder %s23, 0
      %s26 = sadd.s32 %s25, 1
      %s27 = scalar_select %p24, %s25, %s26
      %p30 = pneg %p24
      %p31 = scmp.eq.s32.totalorder %s15, 1
      %p32 = por %p30, %p31
      %p33 = scmp.ne.s32.totalorder %s25, %s28
      %p34 = scmp.eq.s32.totalorder %s15, 0
      %p35 = por %p33, %p34
      %p36 = scmp.ne.s32.totalorder %s25, %s28
      %p37 = scmp.eq.s32.totalorder %s20, 1
      %p38 = por %p36, %p37
      %p39 = scmp.ne.s32.totalorder %s28, %s29
      %p40 = scmp.eq.s32.totalorder %s20, 0
      %p41 = por %p39, %p40
      %p42 = scmp.ne.s32.totalorder %s28, %s29
      %p43 = scmp.eq.s32.totalorder %s21, 1
      %p44 = por %p42, %p43
      %p46 = scmp.ne.s32.totalorder %s29, %s45
      %p47 = scmp.eq.s32.totalorder %s21, 0
      %p48 = por %p46, %p47
      %s49 = ssub.s32 %s15, %s22
      %p50 = scmp.eq.s32.totalorder %s49, 0
      %s52 = sadd.s32 %s51, 1
      %s53 = scalar_select %p50, %s51, %s52
      %p56 = pneg %p50
      %p57 = scmp.eq.s32.totalorder %s15, 1
      %p58 = por %p56, %p57
      %p59 = scmp.ne.s32.totalorder %s51, %s54
      %p60 = scmp.eq.s32.totalorder %s15, 0
      %p61 = por %p59, %p60
      %p62 = scmp.ne.s32.totalorder %s51, %s54
      %p63 = scmp.eq.s32.totalorder %s20, 1
      %p64 = por %p62, %p63
      %p65 = scmp.ne.s32.totalorder %s54, %s55
      %p66 = scmp.eq.s32.totalorder %s20, 0
      %p67 = por %p65, %p66
      %p68 = scmp.ne.s32.totalorder %s54, %s55
      %p69 = scmp.eq.s32.totalorder %s21, 1
      %p70 = por %p68, %p69
      %p72 = scmp.ne.s32.totalorder %s55, %s71
      %p73 = scmp.eq.s32.totalorder %s21, 0
      %p74 = por %p72, %p73
      %s75 = ssub.s32 %s15, %s22
      %p76 = scmp.eq.s32.totalorder %s75, 0
      %s78 = sadd.s32 %s77, 1
      %s79 = scalar_select %p76, %s77, %s78
      %p82 = pneg %p76
      %p83 = scmp.eq.s32.totalorder %s15, 1
      %p84 = por %p82, %p83
      %p85 = scmp.ne.s32.totalorder %s77, %s80
      %p86 = scmp.eq.s32.totalorder %s15, 0
      %p87 = por %p85, %p86
      %p88 = scmp.ne.s32.totalorder %s77, %s80
      %p89 = scmp.eq.s32.totalorder %s20, 1
      %p90 = por %p88, %p89
      %p91 = scmp.ne.s32.totalorder %s80, %s81
      %p92 = scmp.eq.s32.totalorder %s20, 0
      %p93 = por %p91, %p92
      %p94 = scmp.ne.s32.totalorder %s80, %s81
      %p95 = scmp.eq.s32.totalorder %s21, 1
      %p96 = por %p94, %p95
      %p98 = scmp.ne.s32.totalorder %s81, %s97
      %p99 = scmp.eq.s32.totalorder %s21, 0
      %p100 = por %p98, %p99
      %s101 = ssub.s32 %s15, %s22
      %p102 = scmp.eq.s32.totalorder %s101, 0
      %s104 = sadd.s32 %s103, 1
      %s105 = scalar_select %p102, %s103, %s104
      %p108 = pneg %p102
      %p109 = scmp.eq.s32.totalorder %s15, 1
      %p110 = por %p108, %p109
      %p111 = scmp.ne.s32.totalorder %s103, %s106
      %p112 = scmp.eq.s32.totalorder %s15, 0
      %p113 = por %p111, %p112
      %p114 = scmp.ne.s32.totalorder %s103, %s106
      %p115 = scmp.eq.s32.totalorder %s20, 1
      %p116 = por %p114, %p115
      %p117 = scmp.ne.s32.totalorder %s106, %s107
      %p118 = scmp.eq.s32.totalorder %s20, 0
      %p119 = por %p117, %p118
      %p120 = scmp.ne.s32.totalorder %s106, %s107
      %p121 = scmp.eq.s32.totalorder %s21, 1
      %p122 = por %p120, %p121
      %p124 = scmp.ne.s32.totalorder %s107, %s123
      %p125 = scmp.eq.s32.totalorder %s21, 0
      %p126 = por %p124, %p125
      %s127 = ssub.s32 %s15, %s22
      %p128 = scmp.eq.s32.totalorder %s127, 0
      %s130 = sadd.s32 %s129, 1
      %s131 = scalar_select %p128, %s129, %s130
      %p134 = pneg %p128
      %p135 = scmp.eq.s32.totalorder %s15, 1
      %p136 = por %p134, %p135
      %p137 = scmp.ne.s32.totalorder %s129, %s132
      %p138 = scmp.eq.s32.totalorder %s15, 0
      %p139 = por %p137, %p138
      %p140 = scmp.ne.s32.totalorder %s129, %s132
      %p141 = scmp.eq.s32.totalorder %s20, 1
      %p142 = por %p140, %p141
      %p143 = scmp.ne.s32.totalorder %s132, %s133
      %p144 = scmp.eq.s32.totalorder %s20, 0
      %p145 = por %p143, %p144
      %p146 = scmp.ne.s32.totalorder %s132, %s133
      %p147 = scmp.eq.s32.totalorder %s21, 1
      %p148 = por %p146, %p147
      %p150 = scmp.ne.s32.totalorder %s133, %s149
      %p151 = scmp.eq.s32.totalorder %s21, 0
      %p152 = por %p150, %p151
      %s153 = ssub.s32 %s15, %s22
      %p154 = scmp.eq.s32.totalorder %s153, 0
      %s156 = sadd.s32 %s155, 1
      %s157 = scalar_select %p154, %s155, %s156
      %p160 = pneg %p154
      %p161 = scmp.eq.s32.totalorder %s15, 1
      %p162 = por %p160, %p161
      %p163 = scmp.ne.s32.totalorder %s155, %s158
      %p164 = scmp.eq.s32.totalorder %s15, 0
      %p165 = por %p163, %p164
      %p166 = scmp.ne.s32.totalorder %s155, %s158
      %p167 = scmp.eq.s32.totalorder %s20, 1
      %p168 = por %p166, %p167
      %p169 = scmp.ne.s32.totalorder %s158, %s159
      %p170 = scmp.eq.s32.totalorder %s20, 0
      %p171 = por %p169, %p170
      %p172 = scmp.ne.s32.totalorder %s158, %s159
      %p173 = scmp.eq.s32.totalorder %s21, 1
      %p174 = por %p172, %p173
      %p176 = scmp.ne.s32.totalorder %s159, %s175
      %p177 = scmp.eq.s32.totalorder %s21, 0
      %p178 = por %p176, %p177
      %p179 = scmp.le.s32.totalorder 1, %s15
      %p180 = scmp.lt.s32.totalorder %s15, 3
      %p181 = pnand %p179, %p180
      %p182 = pneg %p181
      // Predicated region
      $region9: #{tpu_custom_call.1} parent=5 // pred_check
        _
      $region10: #{tpu_custom_call.1} parent=5 // pred_check_branch
        %184 = sbr.rel (%p181) target = $region12
      $region11: #{tpu_custom_call.1} parent=5 // pred_region
        %s185 = ssub.s32 %s15, 1
      $region12: #{tpu_custom_call.1} parent=5 // pred_fallthru
        _
      %p186 = scmp.lt.s32.totalorder %s15, 2
      // Predicated region
      $region13: #{tpu_custom_call.1} parent=5 // pred_check
        %p187 = pneg %p186
      $region14: #{tpu_custom_call.1} parent=5 // pred_check_branch
        %189 = sbr.rel (%p187) target = $region16
      $region15: #{tpu_custom_call.1} parent=5 // pred_region
        // Predicated region
        $region17: #{tpu_custom_call.1} parent=15 // pred_check
          %p190 = pneg %p35
        $region18: #{tpu_custom_call.1} parent=15 // pred_check_branch
          %192 = sbr.rel (%p190) target = $region20
        $region19: #{tpu_custom_call.1} parent=15 // pred_region
          %p193 = scmp.lt.s32.totalorder %s15, 1
          %s194 = scalar_select %p193, %s15, 1
          %s195 = smul.addr %s194, 8
          %s196 = scalar_lea.vmem %s0, %s195
        $region20: #{tpu_custom_call.1} parent=15 // pred_fallthru
          _
        // Predicated region
        $region21: #{tpu_custom_call.1} parent=15 // pred_check
          %p197 = pneg %p61
        $region22: #{tpu_custom_call.1} parent=15 // pred_check_branch
          %199 = sbr.rel (%p197) target = $region24
        $region23: #{tpu_custom_call.1} parent=15 // pred_region
          %p200 = scmp.lt.s32.totalorder %s15, 1
          %s201 = scalar_select %p200, %s15, 1
          %s202 = smul.addr %s201, 8
          %s203 = scalar_lea.vmem %s1, %s202
        $region24: #{tpu_custom_call.1} parent=15 // pred_fallthru
          _
      $region16: #{tpu_custom_call.1} parent=5 // pred_fallthru
        _
      %p204 = scmp.le.s32.totalorder 1, %s15
      %p205 = scmp.lt.s32.totalorder %s15, 3
      %p206 = pnand %p204, %p205
      %p207 = pneg %p206
      // Predicated region
      $region25: #{tpu_custom_call.1} parent=5 // pred_check
        _
      $region26: #{tpu_custom_call.1} parent=5 // pred_check_branch
        %209 = sbr.rel (%p206) target = $region28
      $region27: #{tpu_custom_call.1} parent=5 // pred_region
        %s210 = ssub.s32 %s15, 1
        %p211 = scmp.lt.s32.totalorder %s20, 1
        %s212 = scalar_select %p211, %s20, 1
        %s213 = smul.addr %s212, 8
        %s214 = scalar_lea.vmem %s0, %s213
        %p215 = pneg %p41
        %p216 = pneg %p38
        %p217 = scmp.lt.s32.totalorder %s20, 1
        %s218 = scalar_select %p217, %s20, 1
        %s219 = smul.addr %s218, 8
        %s220 = scalar_lea.vmem %s1, %s219
        %p221 = pneg %p67
        %p222 = pneg %p64
        %p223 = pneg %p93
        %p224 = pneg %p90
        %s225 = sand.u32 %s80, 1
        %s226 = scalar_lea.sflag [#allocation3], %s225
        %s227 = sand.u32 %s80, 1
        %s228 = smul.addr %s227, 8
        %s229 = scalar_lea.vmem [#allocation2], %s228
        %p230 = pneg %p119
        %p231 = pneg %p116
        %p232 = scmp.lt.s32.totalorder %s20, 1
        %s233 = scalar_select %p232, %s20, 1
        %s234 = smul.addr %s233, 8
        %s235 = scalar_lea.vmem %s3, %s234
        %p236 = pneg %p145
        %p237 = pneg %p142
        %p238 = scmp.lt.s32.totalorder %s20, 1
        %s239 = scalar_select %p238, %s20, 1
        %s240 = smul.addr %s239, 8
        %s241 = scalar_lea.vmem %s4, %s240
        %p242 = pneg %p171
        %p243 = pneg %p168
        %p244 = scmp.lt.s32.totalorder %s20, 1
        %s245 = scalar_select %p244, %s20, 1
        %s246 = smul.addr %s245, 8
        %s247 = scalar_lea.vmem %s5, %s246
        %p248 = scmp.lt.s32.totalorder %s20, 1
        %s249 = scalar_select %p248, %s20, 1
        %s250 = smul.addr %s249, 8
        %s251 = scalar_lea.vmem %s0, %s250
        %p252 = scmp.lt.s32.totalorder %s20, 1
        %s253 = scalar_select %p252, %s20, 1
        %s254 = smul.addr %s253, 8
        %s255 = scalar_lea.vmem %s1, %s254
        %p256 = scmp.lt.s32.totalorder %s20, 1
        %s257 = scalar_select %p256, %s20, 1
        %s258 = smul.addr %s257, 8
        %s259 = scalar_lea.vmem %s3, %s258
        %p260 = scmp.lt.s32.totalorder %s20, 1
        %s261 = scalar_select %p260, %s20, 1
        %s262 = smul.addr %s261, 8
        %s263 = scalar_lea.vmem %s4, %s262
        %p264 = scmp.lt.s32.totalorder %s20, 1
        %s265 = scalar_select %p264, %s20, 1
        %s266 = smul.addr %s265, 8
        %s267 = scalar_lea.vmem %s5, %s266
        %v268 = vld [vmem:[%s251] sm:$0xff]
        %vm269 = vcmask 285696
        %v270 = vsel %vm269, %v268, -inf
        %271 = vmax.xlane.f32.xlu0 %v270
        %v272 = vpop.xlane.xlu0 %271
        %v273 = vsub.f32 %v268, %v272
        %v274 = vlaneseq
        %v275 = vand.u32 %v274, 127
        %vm276 = vcmp.ge.f32.partialorder %v273, 0.0
        %v277 = vsel %vm276, %v275, 2147483647
        %v278 = vsel %vm269, %v277, 2147483647
        %v279 = vand.u32 %v278, 65535
        %v280 = vshra.s32 %v278, 16
        %v281 = vcvt.s32.f32 %v279
        %v282 = vcvt.s32.f32 %v280
        %283 = vmin.xlane.f32.xlu0 %v282
        %v284 = vpop.xlane.xlu0 %283
        %vm285 = vcmp.eq.f32.partialorder %v282, %v284
        %v286 = vsel %vm285, %v281, inf
        %287 = vmin.xlane.f32.xlu0 %v286
        %v288 = vpop.xlane.xlu0 %287
        %v289 = vcvt.f32.s32 %v288
        %v290 = vcvt.f32.s32 %v284
        %v291 = vshll.u32 %v290, 16
        %v292 = vadd.s32 %v291, %v289
        %vm293 = vcmask 7168
        %294 = vst.msk [vmem:[%s259] sm:$0xff] %vm293, %v292
        %v295 = vmul.f32 %v273, 1.442695
        %v296 = vpow.pop %v295
        %v297 = vsel %vm269, %v296, 0.0
        %298 = vadd.xlane.f32.xlu0 %v297
        %v299 = vpop.xlane.xlu0 %298
        %v300 = vlog2.pop %v299
        %v301 = vmul.f32 %v300, 0.6931472
        %v302 = vsub.f32 %v273, %v301
        %303 = vst.msk [vmem:[%s229] sm:$0xff] %vm269, %v302
        %v304 = vld [vmem:[%s255] sm:$0xff]
        %vm305 = vcmask 48128
        %v306 = vsel %vm305, %v304, -inf
        %307 = vmax.xlane.f32.xlu0 %v306
        %v308 = vpop.xlane.xlu0 %307
        %v309 = vsub.f32 %v304, %v308
        %vm310 = vcmp.ge.f32.partialorder %v309, 0.0
        %v311 = vsel %vm310, %v275, 2147483647
        %v312 = vsel %vm305, %v311, 2147483647
        %v313 = vand.u32 %v312, 65535
        %v314 = vshra.s32 %v312, 16
        %v315 = vcvt.s32.f32 %v313
        %v316 = vcvt.s32.f32 %v314
        %317 = vmin.xlane.f32.xlu0 %v316
        %v318 = vpop.xlane.xlu0 %317
        %vm319 = vcmp.eq.f32.partialorder %v316, %v318
        %v320 = vsel %vm319, %v315, inf
        %321 = vmin.xlane.f32.xlu0 %v320
        %v322 = vpop.xlane.xlu0 %321
        %v323 = vcvt.f32.s32 %v322
        %v324 = vcvt.f32.s32 %v318
        %v325 = vshll.u32 %v324, 16
        %v326 = vadd.s32 %v325, %v323
        %327 = vst.msk [vmem:[%s267] sm:$0xff] %vm293, %v326
        %v328 = vmul.f32 %v309, 1.442695
        %v329 = vpow.pop %v328
        %v330 = vsel %vm305, %v329, 0.0
        %331 = vadd.xlane.f32.xlu0 %v330
        %v332 = vpop.xlane.xlu0 %331
        %v333 = vlog2.pop %v332
        %v334 = vmul.f32 %v333, 0.6931472
        %v335 = vsub.f32 %v309, %v334
        %336 = vst.msk [vmem:[%s263] sm:$0xff] %vm305, %v335
        %s337 = sand.u32 %s80, 1
        %s338 = scalar_lea.sflag [#allocation3], %s337
        %s339 = sand.u32 %s80, 1
        %s340 = smul.addr %s339, 8
        %s341 = scalar_lea.vmem [#allocation2], %s340
        %p342 = scmp.lt.s32.totalorder %s20, 1
        %s343 = scalar_select %p342, %s20, 1
        %s344 = smul.addr %s343, 8
        %s345 = scalar_lea.vmem %s3, %s344
        %p346 = scmp.lt.s32.totalorder %s20, 1
        %s347 = scalar_select %p346, %s20, 1
        %s348 = smul.addr %s347, 8
        %s349 = scalar_lea.vmem %s4, %s348
        %p350 = scmp.lt.s32.totalorder %s20, 1
        %s351 = scalar_select %p350, %s20, 1
        %s352 = smul.addr %s351, 8
        %s353 = scalar_lea.vmem %s5, %s352
        // Predicated region
        $region29: #{tpu_custom_call.1} parent=27 // pred_check
          %p354 = pneg %p90
        $region30: #{tpu_custom_call.1} parent=27 // pred_check_branch
          %356 = sbr.rel (%p354) target = $region32
        $region31: #{tpu_custom_call.1} parent=27 // pred_region
          %s358 = ssub.s32 128, 128
          %359 = vsyncadd %s338, %s358
          %s360 = smul.addr %s20, 128
          %s361 = scalar_lea.hbm %s2, %s360
          %s363 = sshll.u32 %s341, 4
          %s364 = int_to_ptr.vmem [resolvable:$true] %s363
          %366 = dma.vmem_to_hbm [thread:$0]  %s364, 128, %s361, %s338
        $region32: #{tpu_custom_call.1} parent=27 // pred_fallthru
          _
        // Predicated region
        $region33: #{tpu_custom_call.1} parent=27 // pred_check
          %p367 = pneg %p116
        $region34: #{tpu_custom_call.1} parent=27 // pred_check_branch
          %369 = sbr.rel (%p367) target = $region36
        $region35: #{tpu_custom_call.1} parent=27 // pred_region
          _
        $region36: #{tpu_custom_call.1} parent=27 // pred_fallthru
          _
        // Predicated region
        $region37: #{tpu_custom_call.1} parent=27 // pred_check
          %p370 = pneg %p142
        $region38: #{tpu_custom_call.1} parent=27 // pred_check_branch
          %372 = sbr.rel (%p370) target = $region40
        $region39: #{tpu_custom_call.1} parent=27 // pred_region
          _
        $region40: #{tpu_custom_call.1} parent=27 // pred_fallthru
          _
        // Predicated region
        $region41: #{tpu_custom_call.1} parent=27 // pred_check
          %p373 = pneg %p168
        $region42: #{tpu_custom_call.1} parent=27 // pred_check_branch
          %375 = sbr.rel (%p373) target = $region44
        $region43: #{tpu_custom_call.1} parent=27 // pred_region
          _
        $region44: #{tpu_custom_call.1} parent=27 // pred_fallthru
          _
      $region28: #{tpu_custom_call.1} parent=5 // pred_fallthru
        _
      %p376 = scmp.le.s32.totalorder 2, %s15
      // Predicated region
      $region45: #{tpu_custom_call.1} parent=5 // pred_check
        %p377 = pneg %p376
      $region46: #{tpu_custom_call.1} parent=5 // pred_check_branch
        %379 = sbr.rel (%p377) target = $region48
      $region47: #{tpu_custom_call.1} parent=5 // pred_region
        %s380 = ssub.s32 %s15, 2
        // Predicated region
        $region49: #{tpu_custom_call.1} parent=47 // pred_check
          %p381 = pneg %p96
        $region50: #{tpu_custom_call.1} parent=47 // pred_check_branch
          %383 = sbr.rel (%p381) target = $region52
        $region51: #{tpu_custom_call.1} parent=47 // pred_region
          %s384 = sand.u32 %s81, 1
          %s385 = scalar_lea.sflag [#allocation3], %s384
          %s386 = sand.u32 %s81, 1
          %s387 = smul.addr %s386, 8
          %s388 = scalar_lea.vmem [#allocation2], %s387
          %389 = dma.done %s385, 128
        $region52: #{tpu_custom_call.1} parent=47 // pred_fallthru
          _
        // Predicated region
        $region53: #{tpu_custom_call.1} parent=47 // pred_check
          %p390 = pneg %p122
        $region54: #{tpu_custom_call.1} parent=47 // pred_check_branch
          %392 = sbr.rel (%p390) target = $region56
        $region55: #{tpu_custom_call.1} parent=47 // pred_region
          %p393 = scmp.lt.s32.totalorder %s21, 1
          %s394 = scalar_select %p393, %s21, 1
          %s395 = smul.addr %s394, 8
          %s396 = scalar_lea.vmem %s3, %s395
        $region56: #{tpu_custom_call.1} parent=47 // pred_fallthru
          _
        // Predicated region
        $region57: #{tpu_custom_call.1} parent=47 // pred_check
          %p397 = pneg %p148
        $region58: #{tpu_custom_call.1} parent=47 // pred_check_branch
          %399 = sbr.rel (%p397) target = $region60
        $region59: #{tpu_custom_call.1} parent=47 // pred_region
          %p400 = scmp.lt.s32.totalorder %s21, 1
          %s401 = scalar_select %p400, %s21, 1
          %s402 = smul.addr %s401, 8
          %s403 = scalar_lea.vmem %s4, %s402
        $region60: #{tpu_custom_call.1} parent=47 // pred_fallthru
          _
        // Predicated region
        $region61: #{tpu_custom_call.1} parent=47 // pred_check
          %p404 = pneg %p174
        $region62: #{tpu_custom_call.1} parent=47 // pred_check_branch
          %406 = sbr.rel (%p404) target = $region64
        $region63: #{tpu_custom_call.1} parent=47 // pred_region
          %p407 = scmp.lt.s32.totalorder %s21, 1
          %s408 = scalar_select %p407, %s21, 1
          %s409 = smul.addr %s408, 8
          %s410 = scalar_lea.vmem %s5, %s409
        $region64: #{tpu_custom_call.1} parent=47 // pred_fallthru
          _
      $region48: #{tpu_custom_call.1} parent=5 // pred_fallthru
        _
    $region6: #{tpu_custom_call.1} parent=1 // loop_footer
      %s19 = sadd.s32 1, %s15
    $region7: #{tpu_custom_call.1} parent=1 // loop_footer_branch
      %14 = sbr.rel target = $region3
    $region8: #{tpu_custom_call.1} parent=1 // loop_exit
      _
    %411 = vsyncpa [#allocation3], 1
    %s412 = scalar_lea.sflag [#allocation3], 1
    %413 = vsyncpa %s412, 1

</llo_original>
